<compile_context>
chip_gen: v7x
topology: tpu7x:2x2x1
jax: 0.10.0
libtpu: 0.0.40
codegen_flags: <defaults>
</compile_context>

<pallas_src>
import jax
import jax.numpy as jnp
from jax.experimental import pallas as pl
from jax.experimental.pallas import tpu as pltpu


def rnn_fc_kernel(xproj_ref, whh_ref, wlin_ref, blin_ref, out_ref):
    """One batch tile: full RNN recurrence + final linear layer.

    xproj_ref : (n, Bt, H)  time-major precomputed W_ih[x_t] + b_ih + b_hh
    whh_ref   : (H, H)      hidden-to-hidden weight (transposed, in x out)
    wlin_ref  : (H, K)      linear weight (transposed, in x out)
    blin_ref  : (1, K)      linear bias
    out_ref   : (Bt, K)     logits
    """
    n = xproj_ref.shape[0]          # static (block shape)
    whh = whh_ref[...]              # hoisted out of the unrolled loop

    # h0 = 0  ->  h1 = tanh(xproj[0] + 0 @ W_hh) = tanh(xproj[0])
    h = jnp.tanh(xproj_ref[0])
    for t in range(1, n):           # n is small & static -> unrolled recurrence
        h = jnp.tanh(xproj_ref[t]
                     + jnp.dot(h, whh, preferred_element_type=jnp.float32))

    logits = (jnp.dot(h, wlin_ref[...], preferred_element_type=jnp.float32)
              + blin_ref[...])
    out_ref[...] = logits.astype(out_ref.dtype)


def full_two_thinning_recurrent_net_fc(x, params, *, batch_tile=None):
    """x: (B, n) int32 loads. Returns (B, K) float32 logits."""
    wih_t, bih, whh_t, bhh, wlin_t, blin = params
    B, n = x.shape
    L, H = wih_t.shape
    K = wlin_t.shape[1]

    # ---- JAX-side glue: sort + gather-based input projection ----
    x_sorted = jnp.sort(x, axis=-1)                              # (B, n)
    valid = (x_sorted >= 0) & (x_sorted < L)
    x_clip = jnp.clip(x_sorted, 0, L - 1)
    # one_hot(x) @ W_ih == W_ih[x]; out-of-range loads contribute a zero row,
    # matching jax.nn.one_hot (and the previous one-hot-matmul kernel).
    rows = jnp.where(valid[..., None], wih_t[x_clip], 0.0)       # (B, n, H)
    xproj = (rows + (bih + bhh)).astype(jnp.float32)             # fold biases once
    xproj = jnp.transpose(xproj, (1, 0, 2))                      # (n, B, H) time-major

    # ---- batch tiling (sublane-aligned, f32 -> multiple of 8) ----
    if batch_tile is None:
        batch_tile = 128 if B >= 128 else 8 * pl.cdiv(B, 8)
    b_pad = pl.cdiv(B, batch_tile) * batch_tile
    if b_pad != B:
        xproj = jnp.pad(xproj, ((0, 0), (0, b_pad - B), (0, 0)))
    num_tiles = b_pad // batch_tile

    out = pl.pallas_call(
        rnn_fc_kernel,
        out_shape=jax.ShapeDtypeStruct((b_pad, K), jnp.float32),
        grid=(num_tiles,),
        in_specs=[
            pl.BlockSpec((n, batch_tile, H), lambda b: (0, b, 0)),   # activations
            pl.BlockSpec((H, H), lambda b: (0, 0)),                  # W_hh (resident)
            pl.BlockSpec((H, K), lambda b: (0, 0)),                  # W_lin (resident)
            pl.BlockSpec((1, K), lambda b: (0, 0)),                  # b_lin (resident)
        ],
        out_specs=pl.BlockSpec((batch_tile, K), lambda b: (b, 0)),
        compiler_params=pltpu.CompilerParams(
            dimension_semantics=("parallel",),   # megacore sharding on v7x
            vmem_limit_bytes=32 << 20,           # safe on v7x's 64 MiB VMEM
        ),
    )(xproj, whh_t, wlin_t, blin.reshape(1, -1))

    return out[:B]


def init_params(key, n, max_threshold, max_possible_load, hidden_size):
    """Deterministic init matching PyTorch nn.RNN / nn.Linear default shapes
    (uniform(-1/sqrt(hidden), 1/sqrt(hidden)))."""
    L = max_possible_load + 1
    K = max_threshold + 1
    H = hidden_size
    ks = jax.random.split(key, 6)
    bound = 1.0 / jnp.sqrt(jnp.float32(H))

    def u(k, shape):
        return jax.random.uniform(k, shape, jnp.float32, -bound, bound)

    w_ih = u(ks[0], (H, L))     # PyTorch layout (hidden, input)
    b_ih = u(ks[1], (H,))
    w_hh = u(ks[2], (H, H))
    b_hh = u(ks[3], (H,))
    w_lin = u(ks[4], (K, H))    # PyTorch layout (out, in)
    b_lin = u(ks[5], (K,))

    # Pre-transpose for the kernel: (in, out).
    return (w_ih.T, b_ih, w_hh.T, b_hh, w_lin.T, b_lin)


def reference_forward(x, params):
    """Pure-JAX reference (float32, one-hot formulation) for a sanity check."""
    wih_t, bih, whh_t, bhh, wlin_t, blin = params
    L = wih_t.shape[0]
    xoh = jax.nn.one_hot(jnp.sort(x, axis=-1), L, dtype=jnp.float32)
    B = x.shape[0]
    h = jnp.zeros((B, whh_t.shape[0]), jnp.float32)
    for t in range(x.shape[1]):
        h = jnp.tanh(xoh[:, t, :] @ wih_t + bih + h @ whh_t + bhh)
    return h @ wlin_t + blin


if __name__ == "__main__":
    # Small, module-consistent shapes.
    batch = 2
    n = 8                    # number of bins == sequence length
    max_possible_load = 10   # -> one-hot size L = 11
    max_threshold = 5        # -> output size K = 6
    hidden_size = 32

    key = jax.random.PRNGKey(0)
    k_param, k_x = jax.random.split(key)

    params = init_params(k_param, n, max_threshold, max_possible_load, hidden_size)
    x = jax.random.randint(k_x, (batch, n), 0, max_possible_load + 1, dtype=jnp.int32)

    out = full_two_thinning_recurrent_net_fc(x, params)
    out = jax.block_until_ready(out)

    ref = reference_forward(x, params)
    assert out.shape == (batch, max_threshold + 1)
    assert jnp.allclose(out, ref, atol=1e-4, rtol=1e-4)

    print("KERNEL_OK")
</pallas_src>

<mosaic_0001>
module attributes {stable_mosaic.version = 11 : i64} {
  func.func @rnn_fc_kernel(%arg0: i32, %arg1: memref<8x8x32xf32, #tpu.memory_space<vmem>>, %arg2: memref<32x32xf32, #tpu.memory_space<vmem>>, %arg3: memref<32x6xf32, #tpu.memory_space<vmem>>, %arg4: memref<1x6xf32, #tpu.memory_space<vmem>>, %arg5: memref<8x6xf32, #tpu.memory_space<vmem>>) attributes {dimension_semantics = [#tpu.dimension_semantics<parallel>], iteration_bounds = array<i64: 1>, scalar_prefetch = 0 : i64, scratch_operands = 0 : i64, tpu.core_type = #tpu.core_type<tc>, window_params = [{transform_indices = @transform_0, window_bounds = array<i64: 8, 8, 32>}, {pipeline_mode = #tpu.pipeline_mode<synchronous>, transform_indices = @transform_1, window_bounds = array<i64: 32, 32>}, {pipeline_mode = #tpu.pipeline_mode<synchronous>, transform_indices = @transform_2, window_bounds = array<i64: 32, 6>}, {pipeline_mode = #tpu.pipeline_mode<synchronous>, transform_indices = @transform_3, window_bounds = array<i64: 1, 6>}, {transform_indices = @transform_4, window_bounds = array<i64: 8, 6>}]} {
    %c0 = arith.constant 0 : index
    %c0_0 = arith.constant 0 : index
    %0 = vector.load %arg2[%c0, %c0_0] : memref<32x32xf32, #tpu.memory_space<vmem>>, vector<32x32xf32>
    %c0_1 = arith.constant 0 : index
    %c0_2 = arith.constant 0 : index
    %c0_3 = arith.constant 0 : index
    %1 = vector.load %arg1[%c0_1, %c0_2, %c0_3] : memref<8x8x32xf32, #tpu.memory_space<vmem>>, vector<1x8x32xf32>
    %2 = vector.shape_cast %1 : vector<1x8x32xf32> to vector<8x32xf32>
    %3 = math.tanh %2 : vector<8x32xf32>
    %c1 = arith.constant 1 : index
    %c0_4 = arith.constant 0 : index
    %c0_5 = arith.constant 0 : index
    %4 = vector.load %arg1[%c1, %c0_4, %c0_5] : memref<8x8x32xf32, #tpu.memory_space<vmem>>, vector<1x8x32xf32>
    %5 = vector.shape_cast %4 : vector<1x8x32xf32> to vector<8x32xf32>
    %cst = arith.constant dense<0.000000e+00> : vector<8x32xf32>
    %6 = tpu.matmul %3, %0, %cst {dimension_numbers = #tpu.dot_dimension_numbers<[1], [0], [0], [1], [0, 0, 1, 1], [], []>} : vector<8x32xf32>, vector<32x32xf32>, vector<8x32xf32> -> vector<8x32xf32>
    %7 = arith.addf %5, %6 : vector<8x32xf32>
    %8 = math.tanh %7 : vector<8x32xf32>
    %c2 = arith.constant 2 : index
    %c0_6 = arith.constant 0 : index
    %c0_7 = arith.constant 0 : index
    %9 = vector.load %arg1[%c2, %c0_6, %c0_7] : memref<8x8x32xf32, #tpu.memory_space<vmem>>, vector<1x8x32xf32>
    %10 = vector.shape_cast %9 : vector<1x8x32xf32> to vector<8x32xf32>
    %cst_8 = arith.constant dense<0.000000e+00> : vector<8x32xf32>
    %11 = tpu.matmul %8, %0, %cst_8 {dimension_numbers = #tpu.dot_dimension_numbers<[1], [0], [0], [1], [0, 0, 1, 1], [], []>} : vector<8x32xf32>, vector<32x32xf32>, vector<8x32xf32> -> vector<8x32xf32>
    %12 = arith.addf %10, %11 : vector<8x32xf32>
    %13 = math.tanh %12 : vector<8x32xf32>
    %c3 = arith.constant 3 : index
    %c0_9 = arith.constant 0 : index
    %c0_10 = arith.constant 0 : index
    %14 = vector.load %arg1[%c3, %c0_9, %c0_10] : memref<8x8x32xf32, #tpu.memory_space<vmem>>, vector<1x8x32xf32>
    %15 = vector.shape_cast %14 : vector<1x8x32xf32> to vector<8x32xf32>
    %cst_11 = arith.constant dense<0.000000e+00> : vector<8x32xf32>
    %16 = tpu.matmul %13, %0, %cst_11 {dimension_numbers = #tpu.dot_dimension_numbers<[1], [0], [0], [1], [0, 0, 1, 1], [], []>} : vector<8x32xf32>, vector<32x32xf32>, vector<8x32xf32> -> vector<8x32xf32>
    %17 = arith.addf %15, %16 : vector<8x32xf32>
    %18 = math.tanh %17 : vector<8x32xf32>
    %c4 = arith.constant 4 : index
    %c0_12 = arith.constant 0 : index
    %c0_13 = arith.constant 0 : index
    %19 = vector.load %arg1[%c4, %c0_12, %c0_13] : memref<8x8x32xf32, #tpu.memory_space<vmem>>, vector<1x8x32xf32>
    %20 = vector.shape_cast %19 : vector<1x8x32xf32> to vector<8x32xf32>
    %cst_14 = arith.constant dense<0.000000e+00> : vector<8x32xf32>
    %21 = tpu.matmul %18, %0, %cst_14 {dimension_numbers = #tpu.dot_dimension_numbers<[1], [0], [0], [1], [0, 0, 1, 1], [], []>} : vector<8x32xf32>, vector<32x32xf32>, vector<8x32xf32> -> vector<8x32xf32>
    %22 = arith.addf %20, %21 : vector<8x32xf32>
    %23 = math.tanh %22 : vector<8x32xf32>
    %c5 = arith.constant 5 : index
    %c0_15 = arith.constant 0 : index
    %c0_16 = arith.constant 0 : index
    %24 = vector.load %arg1[%c5, %c0_15, %c0_16] : memref<8x8x32xf32, #tpu.memory_space<vmem>>, vector<1x8x32xf32>
    %25 = vector.shape_cast %24 : vector<1x8x32xf32> to vector<8x32xf32>
    %cst_17 = arith.constant dense<0.000000e+00> : vector<8x32xf32>
    %26 = tpu.matmul %23, %0, %cst_17 {dimension_numbers = #tpu.dot_dimension_numbers<[1], [0], [0], [1], [0, 0, 1, 1], [], []>} : vector<8x32xf32>, vector<32x32xf32>, vector<8x32xf32> -> vector<8x32xf32>
    %27 = arith.addf %25, %26 : vector<8x32xf32>
    %28 = math.tanh %27 : vector<8x32xf32>
    %c6 = arith.constant 6 : index
    %c0_18 = arith.constant 0 : index
    %c0_19 = arith.constant 0 : index
    %29 = vector.load %arg1[%c6, %c0_18, %c0_19] : memref<8x8x32xf32, #tpu.memory_space<vmem>>, vector<1x8x32xf32>
    %30 = vector.shape_cast %29 : vector<1x8x32xf32> to vector<8x32xf32>
    %cst_20 = arith.constant dense<0.000000e+00> : vector<8x32xf32>
    %31 = tpu.matmul %28, %0, %cst_20 {dimension_numbers = #tpu.dot_dimension_numbers<[1], [0], [0], [1], [0, 0, 1, 1], [], []>} : vector<8x32xf32>, vector<32x32xf32>, vector<8x32xf32> -> vector<8x32xf32>
    %32 = arith.addf %30, %31 : vector<8x32xf32>
    %33 = math.tanh %32 : vector<8x32xf32>
    %c7 = arith.constant 7 : index
    %c0_21 = arith.constant 0 : index
    %c0_22 = arith.constant 0 : index
    %34 = vector.load %arg1[%c7, %c0_21, %c0_22] : memref<8x8x32xf32, #tpu.memory_space<vmem>>, vector<1x8x32xf32>
    %35 = vector.shape_cast %34 : vector<1x8x32xf32> to vector<8x32xf32>
    %cst_23 = arith.constant dense<0.000000e+00> : vector<8x32xf32>
    %36 = tpu.matmul %33, %0, %cst_23 {dimension_numbers = #tpu.dot_dimension_numbers<[1], [0], [0], [1], [0, 0, 1, 1], [], []>} : vector<8x32xf32>, vector<32x32xf32>, vector<8x32xf32> -> vector<8x32xf32>
    %37 = arith.addf %35, %36 : vector<8x32xf32>
    %38 = math.tanh %37 : vector<8x32xf32>
    %c0_24 = arith.constant 0 : index
    %c0_25 = arith.constant 0 : index
    %39 = vector.load %arg3[%c0_24, %c0_25] : memref<32x6xf32, #tpu.memory_space<vmem>>, vector<32x6xf32>
    %cst_26 = arith.constant dense<0.000000e+00> : vector<8x6xf32>
    %40 = tpu.matmul %38, %39, %cst_26 {dimension_numbers = #tpu.dot_dimension_numbers<[1], [0], [0], [1], [0, 0, 1, 1], [], []>} : vector<8x32xf32>, vector<32x6xf32>, vector<8x6xf32> -> vector<8x6xf32>
    %c0_27 = arith.constant 0 : index
    %c0_28 = arith.constant 0 : index
    %41 = vector.load %arg4[%c0_27, %c0_28] : memref<1x6xf32, #tpu.memory_space<vmem>>, vector<1x6xf32>
    %42 = vector.broadcast %41 : vector<1x6xf32> to vector<8x6xf32>
    %43 = arith.addf %40, %42 : vector<8x6xf32>
    %c0_29 = arith.constant 0 : index
    %c0_30 = arith.constant 0 : index
    %44 = vector.load %arg5[%c0_29, %c0_30] : memref<8x6xf32, #tpu.memory_space<vmem>>, vector<8x6xf32>
    tpu.vector_store %arg5[%c0_29, %c0_30], %43 {strides = array<i32>} : memref<8x6xf32, #tpu.memory_space<vmem>>, vector<8x6xf32>,
    return
  }
  func.func @transform_0(%arg0: i32) -> (i32, i32, i32) {
    %c0_i32 = arith.constant 0 : i32
    %c0_i32_0 = arith.constant 0 : i32
    %c0_i32_1 = arith.constant 0 : i32
    return %c0_i32, %arg0, %c0_i32_0 : i32, i32, i32
  }
  func.func @transform_1(%arg0: i32) -> (i32, i32) {
    %c0_i32 = arith.constant 0 : i32
    %c0_i32_0 = arith.constant 0 : i32
    %c0_i32_1 = arith.constant 0 : i32
    return %c0_i32, %c0_i32_0 : i32, i32
  }
  func.func @transform_2(%arg0: i32) -> (i32, i32) {
    %c0_i32 = arith.constant 0 : i32
    %c0_i32_0 = arith.constant 0 : i32
    %c0_i32_1 = arith.constant 0 : i32
    return %c0_i32, %c0_i32_0 : i32, i32
  }
  func.func @transform_3(%arg0: i32) -> (i32, i32) {
    %c0_i32 = arith.constant 0 : i32
    %c0_i32_0 = arith.constant 0 : i32
    %c0_i32_1 = arith.constant 0 : i32
    return %c0_i32, %c0_i32_0 : i32, i32
  }
  func.func @transform_4(%arg0: i32) -> (i32, i32) {
    %c0_i32 = arith.constant 0 : i32
    %c0_i32_0 = arith.constant 0 : i32
    return %arg0, %c0_i32 : i32, i32
  }
}

</mosaic_0001>

<llo_original>
// kernel: tpu_custom_call.1
$region0: #{tpu_custom_call.1}
  #allocation0 [shape = 'u32[]', space=smem, size = 0x4, offset = 0x4, fixed_abs, tag = 'smem constant byte address 0x4 - core index']
  #allocation1 [shape = 'u32[144,128]{1,0:T(1,128)}', space=vmem, size = 0x12000, scoped, tag = 'internal scratch']
  %s0 = inlined_call_operand.hbm [shape: f32[8,8,32], index: 0, kind: input, shape index: {}]
  %s1 = inlined_call_operand.vmem [shape: f32[32,32], index: 1, kind: input, shape index: {}]
  %s2 = inlined_call_operand.vmem [shape: f32[32,6], index: 2, kind: input, shape index: {}]
  %s3 = inlined_call_operand.vmem [shape: f32[1,6], index: 3, kind: input, shape index: {}]
  %s4 = inlined_call_operand.hbm [shape: f32[8,6], index: 4, kind: output, shape index: {}]
  %s5 = sld [smem:[#allocation0]]
  $region30: #{tpu_custom_call.1} parent=0
    _
  %s7 = ssub.s32 1, %s5
  %s8 = scalar_select 0, %s7, %s5
  $region1: #{tpu_custom_call.1} parent=0
    #allocation2 [shape = 'u8[32768]{0}', space=vmem, size = 0x8000, scoped, tag = 'input window, operand 0, single buffered']
    #allocation3 [shape = 's32[1]{0}', space=sflag, size = 0x4, scoped, tag = 'scoped memory for tpu_custom_call.1']
    #allocation4 [shape = 's32[1]{0}', space=sflag, size = 0x4, scoped, tag = 'scoped memory for tpu_custom_call.1']
    #allocation5 [shape = 'u8[4096]{0}', space=vmem, size = 0x1000, scoped, tag = 'output window, operand 0, single buffered']
    %9 = vsyncpa [#allocation3], 0
    %10 = vsyncpa [#allocation4], 0
    // Predicated region
    $region2: #{tpu_custom_call.1} parent=1 // pred_check
      _
    $region3: #{tpu_custom_call.1} parent=1 // pred_check_branch
      %12 = sbr.rel (0) target = $region5
    $region4: #{tpu_custom_call.1} parent=1 // pred_region
      %s14 = ssub.s32 1024, 1024
      %15 = vsyncadd [#allocation3], %s14
      %s16 = sshll.u32 [#allocation2], 4
      %s17 = int_to_ptr.vmem [resolvable:$true] %s16
      %22 = dma.hbm_to_vmem [thread:$0]  %s0, 1024, %s17, [#allocation3], 128, 128, 8
    $region5: #{tpu_custom_call.1} parent=1 // pred_fallthru
      _
    // Predicated region
    $region6: #{tpu_custom_call.1} parent=1 // pred_check
      _
    $region7: #{tpu_custom_call.1} parent=1 // pred_check_branch
      %24 = sbr.rel (0) target = $region9
    $region8: #{tpu_custom_call.1} parent=1 // pred_region
      _
    $region9: #{tpu_custom_call.1} parent=1 // pred_fallthru
      _
    // Predicated region
    $region10: #{tpu_custom_call.1} parent=1 // pred_check
      _
    $region11: #{tpu_custom_call.1} parent=1 // pred_check_branch
      %26 = sbr.rel (0) target = $region13
    $region12: #{tpu_custom_call.1} parent=1 // pred_region
      _
    $region13: #{tpu_custom_call.1} parent=1 // pred_fallthru
      _
    // Predicated region
    $region14: #{tpu_custom_call.1} parent=1 // pred_check
      _
    $region15: #{tpu_custom_call.1} parent=1 // pred_check_branch
      %28 = sbr.rel (0) target = $region17
    $region16: #{tpu_custom_call.1} parent=1 // pred_region
      _
    $region17: #{tpu_custom_call.1} parent=1 // pred_fallthru
      _
    // Predicated region
    $region18: #{tpu_custom_call.1} parent=1 // pred_check
      _
    $region19: #{tpu_custom_call.1} parent=1 // pred_check_branch
      %30 = sbr.rel (0) target = $region21
    $region20: #{tpu_custom_call.1} parent=1 // pred_region
      %31 = dma.done [#allocation3], 1024
    $region21: #{tpu_custom_call.1} parent=1 // pred_fallthru
      _
    %v32 = vld [vmem:[%s1] sm:$0xff]
    %v33 = vld [vmem:[%s1 + $0x8] sm:$0xff]
    %v34 = vld [vmem:[%s1 + $0x10] sm:$0xff]
    %v35 = vld [vmem:[%s1 + $0x18] sm:$0xff]
    %v36 = vld [vmem:[#allocation2] sm:$0xff]
    %v37 = vtanh.pop %v36
    %s38 = scalar_lea.vmem [#allocation2], 8
    %v39 = vld [vmem:[%s38] sm:$0xff]
    %vm40 = vcmask 261120
    %v42 = vsel %vm40, %v37, 0
    %44 = vmatprep.subr.mxu0 0.0
    %45 = vmatpush1.msra.mxu0 %v32
    %46 = vmatprep.subr.mxu0 0.0
    %47 = vmatpush1.msra.mxu0 %v33
    %48 = vmatprep.subr.mxu0 0.0
    %49 = vmatpush1.msra.mxu0 %v34
    %50 = vmatprep.subr.mxu0 0.0
    %51 = vmatpush1.msra.mxu0 %v35
    %52 = vmatprep.subr.mxu0 0.0
    %53 = vmatpush1.msra.mxu0 0.0
    %54 = vmatprep.subr.mxu0 0.0
    %55 = vmatpush1.msra.mxu0 0.0
    %56 = vmatprep.subr.mxu0 0.0
    %57 = vmatpush1.msra.mxu0 0.0
    %58 = vmatprep.subr.mxu0 0.0
    %59 = vmatpush1.msra.mxu0 0.0
    %60 = vmatprep.subr.mxu0 0.0
    %61 = vmatpush1.msra.mxu0 0.0
    %62 = vmatprep.subr.mxu0 0.0
    %63 = vmatpush1.msra.mxu0 0.0
    %64 = vmatprep.subr.mxu0 0.0
    %65 = vmatpush1.msra.mxu0 0.0
    %66 = vmatprep.subr.mxu0 0.0
    %67 = vmatpush1.msra.mxu0 0.0
    %68 = vmatprep.subr.mxu0 0.0
    %69 = vmatpush1.msra.mxu0 0.0
    %70 = vmatprep.subr.mxu0 0.0
    %71 = vmatpush1.msra.mxu0 0.0
    %72 = vmatprep.subr.mxu0 0.0
    %73 = vmatpush1.msra.mxu0 0.0
    %74 = vmatprep.subr.mxu0 0.0
    %75 = vmatpush1.msra.mxu0 0.0
    %76 = vmatprep.subr.mxu0 0.0
    %77 = vmatpush1.msra.mxu0 0.0
    %78 = vmatprep.subr.mxu0 0.0
    %79 = vmatpush1.msra.mxu0 0.0
    %80 = vmatprep.subr.mxu0 0.0
    %81 = vmatpush1.msra.mxu0 0.0
    %82 = vmatprep.subr.mxu0 0.0
    %83 = vmatpush1.msra.mxu0 0.0
    %84 = vmatprep.subr.mxu0 0.0
    %85 = vmatpush1.msra.mxu0 0.0
    %86 = vmatprep.subr.mxu0 0.0
    %87 = vmatpush1.msra.mxu0 0.0
    %88 = vmatprep.subr.mxu0 0.0
    %89 = vmatpush1.msra.mxu0 0.0
    %90 = vmatprep.subr.mxu0 0.0
    %91 = vmatpush1.msra.mxu0 0.0
    %92 = vmatprep.subr.mxu0 0.0
    %93 = vmatpush1.msra.mxu0 0.0
    %94 = vmatprep.subr.mxu0 0.0
    %95 = vmatpush1.msra.mxu0 0.0
    %96 = vmatprep.subr.mxu0 0.0
    %97 = vmatpush1.msra.mxu0 0.0
    %98 = vmatprep.subr.mxu0 0.0
    %99 = vmatpush1.msra.mxu0 0.0
    %100 = vmatprep.subr.mxu0 0.0
    %101 = vmatpush1.msra.mxu0 0.0
    %102 = vmatprep.subr.mxu0 0.0
    %103 = vmatpush1.msra.mxu0 0.0
    %104 = vmatprep.subr.mxu0 0.0
    %105 = vmatpush1.msra.mxu0 0.0
    %106 = vmatprep.subr.mxu0 0.0
    %107 = vmatpush1.msra.mxu0 0.0
    %108 = vmatprep.mubr.f32.mxu0 0.0
    %109 = vmatmul.mubr.f32.gmra.mrb[0].mxu0 %v42
    %v110 = vpop.f32.mrb[0].mxu0
    %v111 = vadd.f32 0.0, %v110
    %v112 = vpop.f32.mrb[0].mxu0
    %113 = vdwg.mxu0
    %v114 = vadd.f32 %v39, %v111
    %v115 = vtanh.pop %v114
    %s116 = scalar_lea.vmem [#allocation2], 16
    %v117 = vld [vmem:[%s116] sm:$0xff]
    %v119 = vsel %vm40, %v115, 0
    %121 = vmatprep.subr.mxu0 0.0
    %122 = vmatpush1.msra.mxu0 %v32
    %123 = vmatprep.subr.mxu0 0.0
    %124 = vmatpush1.msra.mxu0 %v33
    %125 = vmatprep.subr.mxu0 0.0
    %126 = vmatpush1.msra.mxu0 %v34
    %127 = vmatprep.subr.mxu0 0.0
    %128 = vmatpush1.msra.mxu0 %v35
    %129 = vmatprep.subr.mxu0 0.0
    %130 = vmatpush1.msra.mxu0 0.0
    %131 = vmatprep.subr.mxu0 0.0
    %132 = vmatpush1.msra.mxu0 0.0
    %133 = vmatprep.subr.mxu0 0.0
    %134 = vmatpush1.msra.mxu0 0.0
    %135 = vmatprep.subr.mxu0 0.0
    %136 = vmatpush1.msra.mxu0 0.0
    %137 = vmatprep.subr.mxu0 0.0
    %138 = vmatpush1.msra.mxu0 0.0
    %139 = vmatprep.subr.mxu0 0.0
    %140 = vmatpush1.msra.mxu0 0.0
    %141 = vmatprep.subr.mxu0 0.0
    %142 = vmatpush1.msra.mxu0 0.0
    %143 = vmatprep.subr.mxu0 0.0
    %144 = vmatpush1.msra.mxu0 0.0
    %145 = vmatprep.subr.mxu0 0.0
    %146 = vmatpush1.msra.mxu0 0.0
    %147 = vmatprep.subr.mxu0 0.0
    %148 = vmatpush1.msra.mxu0 0.0
    %149 = vmatprep.subr.mxu0 0.0
    %150 = vmatpush1.msra.mxu0 0.0
    %151 = vmatprep.subr.mxu0 0.0
    %152 = vmatpush1.msra.mxu0 0.0
    %153 = vmatprep.subr.mxu0 0.0
    %154 = vmatpush1.msra.mxu0 0.0
    %155 = vmatprep.subr.mxu0 0.0
    %156 = vmatpush1.msra.mxu0 0.0
    %157 = vmatprep.subr.mxu0 0.0
    %158 = vmatpush1.msra.mxu0 0.0
    %159 = vmatprep.subr.mxu0 0.0
    %160 = vmatpush1.msra.mxu0 0.0
    %161 = vmatprep.subr.mxu0 0.0
    %162 = vmatpush1.msra.mxu0 0.0
    %163 = vmatprep.subr.mxu0 0.0
    %164 = vmatpush1.msra.mxu0 0.0
    %165 = vmatprep.subr.mxu0 0.0
    %166 = vmatpush1.msra.mxu0 0.0
    %167 = vmatprep.subr.mxu0 0.0
    %168 = vmatpush1.msra.mxu0 0.0
    %169 = vmatprep.subr.mxu0 0.0
    %170 = vmatpush1.msra.mxu0 0.0
    %171 = vmatprep.subr.mxu0 0.0
    %172 = vmatpush1.msra.mxu0 0.0
    %173 = vmatprep.subr.mxu0 0.0
    %174 = vmatpush1.msra.mxu0 0.0
    %175 = vmatprep.subr.mxu0 0.0
    %176 = vmatpush1.msra.mxu0 0.0
    %177 = vmatprep.subr.mxu0 0.0
    %178 = vmatpush1.msra.mxu0 0.0
    %179 = vmatprep.subr.mxu0 0.0
    %180 = vmatpush1.msra.mxu0 0.0
    %181 = vmatprep.subr.mxu0 0.0
    %182 = vmatpush1.msra.mxu0 0.0
    %183 = vmatprep.subr.mxu0 0.0
    %184 = vmatpush1.msra.mxu0 0.0
    %185 = vmatprep.mubr.f32.mxu0 0.0
    %186 = vmatmul.mubr.f32.gmra.mrb[0].mxu0 %v119
    %v187 = vpop.f32.mrb[0].mxu0
    %v188 = vadd.f32 0.0, %v187
    %v189 = vpop.f32.mrb[0].mxu0
    %190 = vdwg.mxu0
    %v191 = vadd.f32 %v117, %v188
    %v192 = vtanh.pop %v191
    %s193 = scalar_lea.vmem [#allocation2], 24
    %v194 = vld [vmem:[%s193] sm:$0xff]
    %v196 = vsel %vm40, %v192, 0
    %198 = vmatprep.subr.mxu0 0.0
    %199 = vmatpush1.msra.mxu0 %v32
    %200 = vmatprep.subr.mxu0 0.0
    %201 = vmatpush1.msra.mxu0 %v33
    %202 = vmatprep.subr.mxu0 0.0
    %203 = vmatpush1.msra.mxu0 %v34
    %204 = vmatprep.subr.mxu0 0.0
    %205 = vmatpush1.msra.mxu0 %v35
    %206 = vmatprep.subr.mxu0 0.0
    %207 = vmatpush1.msra.mxu0 0.0
    %208 = vmatprep.subr.mxu0 0.0
    %209 = vmatpush1.msra.mxu0 0.0
    %210 = vmatprep.subr.mxu0 0.0
    %211 = vmatpush1.msra.mxu0 0.0
    %212 = vmatprep.subr.mxu0 0.0
    %213 = vmatpush1.msra.mxu0 0.0
    %214 = vmatprep.subr.mxu0 0.0
    %215 = vmatpush1.msra.mxu0 0.0
    %216 = vmatprep.subr.mxu0 0.0
    %217 = vmatpush1.msra.mxu0 0.0
    %218 = vmatprep.subr.mxu0 0.0
    %219 = vmatpush1.msra.mxu0 0.0
    %220 = vmatprep.subr.mxu0 0.0
    %221 = vmatpush1.msra.mxu0 0.0
    %222 = vmatprep.subr.mxu0 0.0
    %223 = vmatpush1.msra.mxu0 0.0
    %224 = vmatprep.subr.mxu0 0.0
    %225 = vmatpush1.msra.mxu0 0.0
    %226 = vmatprep.subr.mxu0 0.0
    %227 = vmatpush1.msra.mxu0 0.0
    %228 = vmatprep.subr.mxu0 0.0
    %229 = vmatpush1.msra.mxu0 0.0
    %230 = vmatprep.subr.mxu0 0.0
    %231 = vmatpush1.msra.mxu0 0.0
    %232 = vmatprep.subr.mxu0 0.0
    %233 = vmatpush1.msra.mxu0 0.0
    %234 = vmatprep.subr.mxu0 0.0
    %235 = vmatpush1.msra.mxu0 0.0
    %236 = vmatprep.subr.mxu0 0.0
    %237 = vmatpush1.msra.mxu0 0.0
    %238 = vmatprep.subr.mxu0 0.0
    %239 = vmatpush1.msra.mxu0 0.0
    %240 = vmatprep.subr.mxu0 0.0
    %241 = vmatpush1.msra.mxu0 0.0
    %242 = vmatprep.subr.mxu0 0.0
    %243 = vmatpush1.msra.mxu0 0.0
    %244 = vmatprep.subr.mxu0 0.0
    %245 = vmatpush1.msra.mxu0 0.0
    %246 = vmatprep.subr.mxu0 0.0
    %247 = vmatpush1.msra.mxu0 0.0
    %248 = vmatprep.subr.mxu0 0.0
    %249 = vmatpush1.msra.mxu0 0.0
    %250 = vmatprep.subr.mxu0 0.0
    %251 = vmatpush1.msra.mxu0 0.0
    %252 = vmatprep.subr.mxu0 0.0
    %253 = vmatpush1.msra.mxu0 0.0
    %254 = vmatprep.subr.mxu0 0.0
    %255 = vmatpush1.msra.mxu0 0.0
    %256 = vmatprep.subr.mxu0 0.0
    %257 = vmatpush1.msra.mxu0 0.0
    %258 = vmatprep.subr.mxu0 0.0
    %259 = vmatpush1.msra.mxu0 0.0
    %260 = vmatprep.subr.mxu0 0.0
    %261 = vmatpush1.msra.mxu0 0.0
    %262 = vmatprep.mubr.f32.mxu0 0.0
    %263 = vmatmul.mubr.f32.gmra.mrb[0].mxu0 %v196
    %v264 = vpop.f32.mrb[0].mxu0
    %v265 = vadd.f32 0.0, %v264
    %v266 = vpop.f32.mrb[0].mxu0
    %267 = vdwg.mxu0
    %v268 = vadd.f32 %v194, %v265
    %v269 = vtanh.pop %v268
    %s270 = scalar_lea.vmem [#allocation2], 32
    %v271 = vld [vmem:[%s270] sm:$0xff]
    %v273 = vsel %vm40, %v269, 0
    %275 = vmatprep.subr.mxu0 0.0
    %276 = vmatpush1.msra.mxu0 %v32
    %277 = vmatprep.subr.mxu0 0.0
    %278 = vmatpush1.msra.mxu0 %v33
    %279 = vmatprep.subr.mxu0 0.0
    %280 = vmatpush1.msra.mxu0 %v34
    %281 = vmatprep.subr.mxu0 0.0
    %282 = vmatpush1.msra.mxu0 %v35
    %283 = vmatprep.subr.mxu0 0.0
    %284 = vmatpush1.msra.mxu0 0.0
    %285 = vmatprep.subr.mxu0 0.0
    %286 = vmatpush1.msra.mxu0 0.0
    %287 = vmatprep.subr.mxu0 0.0
    %288 = vmatpush1.msra.mxu0 0.0
    %289 = vmatprep.subr.mxu0 0.0
    %290 = vmatpush1.msra.mxu0 0.0
    %291 = vmatprep.subr.mxu0 0.0
    %292 = vmatpush1.msra.mxu0 0.0
    %293 = vmatprep.subr.mxu0 0.0
    %294 = vmatpush1.msra.mxu0 0.0
    %295 = vmatprep.subr.mxu0 0.0
    %296 = vmatpush1.msra.mxu0 0.0
    %297 = vmatprep.subr.mxu0 0.0
    %298 = vmatpush1.msra.mxu0 0.0
    %299 = vmatprep.subr.mxu0 0.0
    %300 = vmatpush1.msra.mxu0 0.0
    %301 = vmatprep.subr.mxu0 0.0
    %302 = vmatpush1.msra.mxu0 0.0
    %303 = vmatprep.subr.mxu0 0.0
    %304 = vmatpush1.msra.mxu0 0.0
    %305 = vmatprep.subr.mxu0 0.0
    %306 = vmatpush1.msra.mxu0 0.0
    %307 = vmatprep.subr.mxu0 0.0
    %308 = vmatpush1.msra.mxu0 0.0
    %309 = vmatprep.subr.mxu0 0.0
    %310 = vmatpush1.msra.mxu0 0.0
    %311 = vmatprep.subr.mxu0 0.0
    %312 = vmatpush1.msra.mxu0 0.0
    %313 = vmatprep.subr.mxu0 0.0
    %314 = vmatpush1.msra.mxu0 0.0
    %315 = vmatprep.subr.mxu0 0.0
    %316 = vmatpush1.msra.mxu0 0.0
    %317 = vmatprep.subr.mxu0 0.0
    %318 = vmatpush1.msra.mxu0 0.0
    %319 = vmatprep.subr.mxu0 0.0
    %320 = vmatpush1.msra.mxu0 0.0
    %321 = vmatprep.subr.mxu0 0.0
    %322 = vmatpush1.msra.mxu0 0.0
    %323 = vmatprep.subr.mxu0 0.0
    %324 = vmatpush1.msra.mxu0 0.0
    %325 = vmatprep.subr.mxu0 0.0
    %326 = vmatpush1.msra.mxu0 0.0
    %327 = vmatprep.subr.mxu0 0.0
    %328 = vmatpush1.msra.mxu0 0.0
    %329 = vmatprep.subr.mxu0 0.0
    %330 = vmatpush1.msra.mxu0 0.0
    %331 = vmatprep.subr.mxu0 0.0
    %332 = vmatpush1.msra.mxu0 0.0
    %333 = vmatprep.subr.mxu0 0.0
    %334 = vmatpush1.msra.mxu0 0.0
    %335 = vmatprep.subr.mxu0 0.0
    %336 = vmatpush1.msra.mxu0 0.0
    %337 = vmatprep.subr.mxu0 0.0
    %338 = vmatpush1.msra.mxu0 0.0
    %339 = vmatprep.mubr.f32.mxu0 0.0
    %340 = vmatmul.mubr.f32.gmra.mrb[0].mxu0 %v273
    %v341 = vpop.f32.mrb[0].mxu0
    %v342 = vadd.f32 0.0, %v341
    %v343 = vpop.f32.mrb[0].mxu0
    %344 = vdwg.mxu0
    %v345 = vadd.f32 %v271, %v342
    %v346 = vtanh.pop %v345
    %s347 = scalar_lea.vmem [#allocation2], 40
    %v348 = vld [vmem:[%s347] sm:$0xff]
    %v350 = vsel %vm40, %v346, 0
    %352 = vmatprep.subr.mxu0 0.0
    %353 = vmatpush1.msra.mxu0 %v32
    %354 = vmatprep.subr.mxu0 0.0
    %355 = vmatpush1.msra.mxu0 %v33
    %356 = vmatprep.subr.mxu0 0.0
    %357 = vmatpush1.msra.mxu0 %v34
    %358 = vmatprep.subr.mxu0 0.0
    %359 = vmatpush1.msra.mxu0 %v35
    %360 = vmatprep.subr.mxu0 0.0
    %361 = vmatpush1.msra.mxu0 0.0
    %362 = vmatprep.subr.mxu0 0.0
    %363 = vmatpush1.msra.mxu0 0.0
    %364 = vmatprep.subr.mxu0 0.0
    %365 = vmatpush1.msra.mxu0 0.0
    %366 = vmatprep.subr.mxu0 0.0
    %367 = vmatpush1.msra.mxu0 0.0
    %368 = vmatprep.subr.mxu0 0.0
    %369 = vmatpush1.msra.mxu0 0.0
    %370 = vmatprep.subr.mxu0 0.0
    %371 = vmatpush1.msra.mxu0 0.0
    %372 = vmatprep.subr.mxu0 0.0
    %373 = vmatpush1.msra.mxu0 0.0
    %374 = vmatprep.subr.mxu0 0.0
    %375 = vmatpush1.msra.mxu0 0.0
    %376 = vmatprep.subr.mxu0 0.0
    %377 = vmatpush1.msra.mxu0 0.0
    %378 = vmatprep.subr.mxu0 0.0
    %379 = vmatpush1.msra.mxu0 0.0
    %380 = vmatprep.subr.mxu0 0.0
    %381 = vmatpush1.msra.mxu0 0.0
    %382 = vmatprep.subr.mxu0 0.0
    %383 = vmatpush1.msra.mxu0 0.0
    %384 = vmatprep.subr.mxu0 0.0
    %385 = vmatpush1.msra.mxu0 0.0
    %386 = vmatprep.subr.mxu0 0.0
    %387 = vmatpush1.msra.mxu0 0.0
    %388 = vmatprep.subr.mxu0 0.0
    %389 = vmatpush1.msra.mxu0 0.0
    %390 = vmatprep.subr.mxu0 0.0
    %391 = vmatpush1.msra.mxu0 0.0
    %392 = vmatprep.subr.mxu0 0.0
    %393 = vmatpush1.msra.mxu0 0.0
    %394 = vmatprep.subr.mxu0 0.0
    %395 = vmatpush1.msra.mxu0 0.0
    %396 = vmatprep.subr.mxu0 0.0
    %397 = vmatpush1.msra.mxu0 0.0
    %398 = vmatprep.subr.mxu0 0.0
    %399 = vmatpush1.msra.mxu0 0.0
    %400 = vmatprep.subr.mxu0 0.0
    %401 = vmatpush1.msra.mxu0 0.0
    %402 = vmatprep.subr.mxu0 0.0
    %403 = vmatpush1.msra.mxu0 0.0
    %404 = vmatprep.subr.mxu0 0.0
    %405 = vmatpush1.msra.mxu0 0.0
    %406 = vmatprep.subr.mxu0 0.0
    %407 = vmatpush1.msra.mxu0 0.0
    %408 = vmatprep.subr.mxu0 0.0
    %409 = vmatpush1.msra.mxu0 0.0
    %410 = vmatprep.subr.mxu0 0.0
    %411 = vmatpush1.msra.mxu0 0.0
    %412 = vmatprep.subr.mxu0 0.0
    %413 = vmatpush1.msra.mxu0 0.0
    %414 = vmatprep.subr.mxu0 0.0
    %415 = vmatpush1.msra.mxu0 0.0
    %416 = vmatprep.mubr.f32.mxu0 0.0
    %417 = vmatmul.mubr.f32.gmra.mrb[0].mxu0 %v350
    %v418 = vpop.f32.mrb[0].mxu0
    %v419 = vadd.f32 0.0, %v418
    %v420 = vpop.f32.mrb[0].mxu0
    %421 = vdwg.mxu0
    %v422 = vadd.f32 %v348, %v419
    %v423 = vtanh.pop %v422
    %s424 = scalar_lea.vmem [#allocation2], 48
    %v425 = vld [vmem:[%s424] sm:$0xff]
    %v427 = vsel %vm40, %v423, 0
    %429 = vmatprep.subr.mxu0 0.0
    %430 = vmatpush1.msra.mxu0 %v32
    %431 = vmatprep.subr.mxu0 0.0
    %432 = vmatpush1.msra.mxu0 %v33
    %433 = vmatprep.subr.mxu0 0.0
    %434 = vmatpush1.msra.mxu0 %v34
    %435 = vmatprep.subr.mxu0 0.0
    %436 = vmatpush1.msra.mxu0 %v35
    %437 = vmatprep.subr.mxu0 0.0
    %438 = vmatpush1.msra.mxu0 0.0
    %439 = vmatprep.subr.mxu0 0.0
    %440 = vmatpush1.msra.mxu0 0.0
    %441 = vmatprep.subr.mxu0 0.0
    %442 = vmatpush1.msra.mxu0 0.0
    %443 = vmatprep.subr.mxu0 0.0
    %444 = vmatpush1.msra.mxu0 0.0
    %445 = vmatprep.subr.mxu0 0.0
    %446 = vmatpush1.msra.mxu0 0.0
    %447 = vmatprep.subr.mxu0 0.0
    %448 = vmatpush1.msra.mxu0 0.0
    %449 = vmatprep.subr.mxu0 0.0
    %450 = vmatpush1.msra.mxu0 0.0
    %451 = vmatprep.subr.mxu0 0.0
    %452 = vmatpush1.msra.mxu0 0.0
    %453 = vmatprep.subr.mxu0 0.0
    %454 = vmatpush1.msra.mxu0 0.0
    %455 = vmatprep.subr.mxu0 0.0
    %456 = vmatpush1.msra.mxu0 0.0
    %457 = vmatprep.subr.mxu0 0.0
    %458 = vmatpush1.msra.mxu0 0.0
    %459 = vmatprep.subr.mxu0 0.0
    %460 = vmatpush1.msra.mxu0 0.0
    %461 = vmatprep.subr.mxu0 0.0
    %462 = vmatpush1.msra.mxu0 0.0
    %463 = vmatprep.subr.mxu0 0.0
    %464 = vmatpush1.msra.mxu0 0.0
    %465 = vmatprep.subr.mxu0 0.0
    %466 = vmatpush1.msra.mxu0 0.0
    %467 = vmatprep.subr.mxu0 0.0
    %468 = vmatpush1.msra.mxu0 0.0
    %469 = vmatprep.subr.mxu0 0.0
    %470 = vmatpush1.msra.mxu0 0.0
    %471 = vmatprep.subr.mxu0 0.0
    %472 = vmatpush1.msra.mxu0 0.0
    %473 = vmatprep.subr.mxu0 0.0
    %474 = vmatpush1.msra.mxu0 0.0
    %475 = vmatprep.subr.mxu0 0.0
    %476 = vmatpush1.msra.mxu0 0.0
    %477 = vmatprep.subr.mxu0 0.0
    %478 = vmatpush1.msra.mxu0 0.0
    %479 = vmatprep.subr.mxu0 0.0
    %480 = vmatpush1.msra.mxu0 0.0
    %481 = vmatprep.subr.mxu0 0.0
    %482 = vmatpush1.msra.mxu0 0.0
    %483 = vmatprep.subr.mxu0 0.0
    %484 = vmatpush1.msra.mxu0 0.0
    %485 = vmatprep.subr.mxu0 0.0
    %486 = vmatpush1.msra.mxu0 0.0
    %487 = vmatprep.subr.mxu0 0.0
    %488 = vmatpush1.msra.mxu0 0.0
    %489 = vmatprep.subr.mxu0 0.0
    %490 = vmatpush1.msra.mxu0 0.0
    %491 = vmatprep.subr.mxu0 0.0
    %492 = vmatpush1.msra.mxu0 0.0
    %493 = vmatprep.mubr.f32.mxu0 0.0
    %494 = vmatmul.mubr.f32.gmra.mrb[0].mxu0 %v427
    %v495 = vpop.f32.mrb[0].mxu0
    %v496 = vadd.f32 0.0, %v495
    %v497 = vpop.f32.mrb[0].mxu0
    %498 = vdwg.mxu0
    %v499 = vadd.f32 %v425, %v496
    %v500 = vtanh.pop %v499
    %s501 = scalar_lea.vmem [#allocation2], 56
    %v502 = vld [vmem:[%s501] sm:$0xff]
    %v504 = vsel %vm40, %v500, 0
    %506 = vmatprep.subr.mxu0 0.0
    %507 = vmatpush1.msra.mxu0 %v32
    %508 = vmatprep.subr.mxu0 0.0
    %509 = vmatpush1.msra.mxu0 %v33
    %510 = vmatprep.subr.mxu0 0.0
    %511 = vmatpush1.msra.mxu0 %v34
    %512 = vmatprep.subr.mxu0 0.0
    %513 = vmatpush1.msra.mxu0 %v35
    %514 = vmatprep.subr.mxu0 0.0
    %515 = vmatpush1.msra.mxu0 0.0
    %516 = vmatprep.subr.mxu0 0.0
    %517 = vmatpush1.msra.mxu0 0.0
    %518 = vmatprep.subr.mxu0 0.0
    %519 = vmatpush1.msra.mxu0 0.0
    %520 = vmatprep.subr.mxu0 0.0
    %521 = vmatpush1.msra.mxu0 0.0
    %522 = vmatprep.subr.mxu0 0.0
    %523 = vmatpush1.msra.mxu0 0.0
    %524 = vmatprep.subr.mxu0 0.0
    %525 = vmatpush1.msra.mxu0 0.0
    %526 = vmatprep.subr.mxu0 0.0
    %527 = vmatpush1.msra.mxu0 0.0
    %528 = vmatprep.subr.mxu0 0.0
    %529 = vmatpush1.msra.mxu0 0.0
    %530 = vmatprep.subr.mxu0 0.0
    %531 = vmatpush1.msra.mxu0 0.0
    %532 = vmatprep.subr.mxu0 0.0
    %533 = vmatpush1.msra.mxu0 0.0
    %534 = vmatprep.subr.mxu0 0.0
    %535 = vmatpush1.msra.mxu0 0.0
    %536 = vmatprep.subr.mxu0 0.0
    %537 = vmatpush1.msra.mxu0 0.0
    %538 = vmatprep.subr.mxu0 0.0
    %539 = vmatpush1.msra.mxu0 0.0
    %540 = vmatprep.subr.mxu0 0.0
    %541 = vmatpush1.msra.mxu0 0.0
    %542 = vmatprep.subr.mxu0 0.0
    %543 = vmatpush1.msra.mxu0 0.0
    %544 = vmatprep.subr.mxu0 0.0
    %545 = vmatpush1.msra.mxu0 0.0
    %546 = vmatprep.subr.mxu0 0.0
    %547 = vmatpush1.msra.mxu0 0.0
    %548 = vmatprep.subr.mxu0 0.0
    %549 = vmatpush1.msra.mxu0 0.0
    %550 = vmatprep.subr.mxu0 0.0
    %551 = vmatpush1.msra.mxu0 0.0
    %552 = vmatprep.subr.mxu0 0.0
    %553 = vmatpush1.msra.mxu0 0.0
    %554 = vmatprep.subr.mxu0 0.0
    %555 = vmatpush1.msra.mxu0 0.0
    %556 = vmatprep.subr.mxu0 0.0
    %557 = vmatpush1.msra.mxu0 0.0
    %558 = vmatprep.subr.mxu0 0.0
    %559 = vmatpush1.msra.mxu0 0.0
    %560 = vmatprep.subr.mxu0 0.0
    %561 = vmatpush1.msra.mxu0 0.0
    %562 = vmatprep.subr.mxu0 0.0
    %563 = vmatpush1.msra.mxu0 0.0
    %564 = vmatprep.subr.mxu0 0.0
    %565 = vmatpush1.msra.mxu0 0.0
    %566 = vmatprep.subr.mxu0 0.0
    %567 = vmatpush1.msra.mxu0 0.0
    %568 = vmatprep.subr.mxu0 0.0
    %569 = vmatpush1.msra.mxu0 0.0
    %570 = vmatprep.mubr.f32.mxu0 0.0
    %571 = vmatmul.mubr.f32.gmra.mrb[0].mxu0 %v504
    %v572 = vpop.f32.mrb[0].mxu0
    %v573 = vadd.f32 0.0, %v572
    %v574 = vpop.f32.mrb[0].mxu0
    %575 = vdwg.mxu0
    %v576 = vadd.f32 %v502, %v573
    %v577 = vtanh.pop %v576
    %v578 = vld [vmem:[%s2] sm:$0xff]
    %v579 = vld [vmem:[%s2 + $0x8] sm:$0xff]
    %v580 = vld [vmem:[%s2 + $0x10] sm:$0xff]
    %v581 = vld [vmem:[%s2 + $0x18] sm:$0xff]
    %v582 = vld [vmem:[%s3] sm:$0x1]
    %v584 = vlaneseq
    %v585 = vshrl.u32 %v584, 7
    %v586 = vsub.s32 0, %v585
    %v587 = vrot.slane %v582, %v586
    %v590 = vsel %vm40, %v577, 0
    %592 = vmatprep.subr.mxu0 0.0
    %593 = vmatpush1.msra.mxu0 %v578
    %594 = vmatprep.subr.mxu0 0.0
    %595 = vmatpush1.msra.mxu0 %v579
    %596 = vmatprep.subr.mxu0 0.0
    %597 = vmatpush1.msra.mxu0 %v580
    %598 = vmatprep.subr.mxu0 0.0
    %599 = vmatpush1.msra.mxu0 %v581
    %600 = vmatprep.subr.mxu0 0.0
    %601 = vmatpush1.msra.mxu0 0.0
    %602 = vmatprep.subr.mxu0 0.0
    %603 = vmatpush1.msra.mxu0 0.0
    %604 = vmatprep.subr.mxu0 0.0
    %605 = vmatpush1.msra.mxu0 0.0
    %606 = vmatprep.subr.mxu0 0.0
    %607 = vmatpush1.msra.mxu0 0.0
    %608 = vmatprep.subr.mxu0 0.0
    %609 = vmatpush1.msra.mxu0 0.0
    %610 = vmatprep.subr.mxu0 0.0
    %611 = vmatpush1.msra.mxu0 0.0
    %612 = vmatprep.subr.mxu0 0.0
    %613 = vmatpush1.msra.mxu0 0.0
    %614 = vmatprep.subr.mxu0 0.0
    %615 = vmatpush1.msra.mxu0 0.0
    %616 = vmatprep.subr.mxu0 0.0
    %617 = vmatpush1.msra.mxu0 0.0
    %618 = vmatprep.subr.mxu0 0.0
    %619 = vmatpush1.msra.mxu0 0.0
    %620 = vmatprep.subr.mxu0 0.0
    %621 = vmatpush1.msra.mxu0 0.0
    %622 = vmatprep.subr.mxu0 0.0
    %623 = vmatpush1.msra.mxu0 0.0
    %624 = vmatprep.subr.mxu0 0.0
    %625 = vmatpush1.msra.mxu0 0.0
    %626 = vmatprep.subr.mxu0 0.0
    %627 = vmatpush1.msra.mxu0 0.0
    %628 = vmatprep.subr.mxu0 0.0
    %629 = vmatpush1.msra.mxu0 0.0
    %630 = vmatprep.subr.mxu0 0.0
    %631 = vmatpush1.msra.mxu0 0.0
    %632 = vmatprep.subr.mxu0 0.0
    %633 = vmatpush1.msra.mxu0 0.0
    %634 = vmatprep.subr.mxu0 0.0
    %635 = vmatpush1.msra.mxu0 0.0
    %636 = vmatprep.subr.mxu0 0.0
    %637 = vmatpush1.msra.mxu0 0.0
    %638 = vmatprep.subr.mxu0 0.0
    %639 = vmatpush1.msra.mxu0 0.0
    %640 = vmatprep.subr.mxu0 0.0
    %641 = vmatpush1.msra.mxu0 0.0
    %642 = vmatprep.subr.mxu0 0.0
    %643 = vmatpush1.msra.mxu0 0.0
    %644 = vmatprep.subr.mxu0 0.0
    %645 = vmatpush1.msra.mxu0 0.0
    %646 = vmatprep.subr.mxu0 0.0
    %647 = vmatpush1.msra.mxu0 0.0
    %648 = vmatprep.subr.mxu0 0.0
    %649 = vmatpush1.msra.mxu0 0.0
    %650 = vmatprep.subr.mxu0 0.0
    %651 = vmatpush1.msra.mxu0 0.0
    %652 = vmatprep.subr.mxu0 0.0
    %653 = vmatpush1.msra.mxu0 0.0
    %654 = vmatprep.subr.mxu0 0.0
    %655 = vmatpush1.msra.mxu0 0.0
    %656 = vmatprep.mubr.f32.mxu0 0.0
    %657 = vmatmul.mubr.f32.gmra.mrb[0].mxu0 %v590
    %v658 = vpop.f32.mrb[0].mxu0
    %v659 = vadd.f32 %v587, %v658
    %v660 = vpop.f32.mrb[0].mxu0
    %661 = vdwg.mxu0
    %vm662 = vcmask 48128
    %663 = vst.msk [vmem:[#allocation5] sm:$0xff] %vm662, %v659
    // Predicated region
    $region22: #{tpu_custom_call.1} parent=1 // pred_check
      _
    $region23: #{tpu_custom_call.1} parent=1 // pred_check_branch
      %665 = sbr.rel (0) target = $region25
    $region24: #{tpu_custom_call.1} parent=1 // pred_region
      %s667 = ssub.s32 128, 128
      %668 = vsyncadd [#allocation4], %s667
      %s670 = sshll.u32 [#allocation5], 4
      %s671 = int_to_ptr.vmem [resolvable:$true] %s670
      %673 = dma.vmem_to_hbm [thread:$0]  %s671, 128, %s4, [#allocation4]
    $region25: #{tpu_custom_call.1} parent=1 // pred_fallthru
      _
    // Predicated region
    $region26: #{tpu_custom_call.1} parent=1 // pred_check
      _
    $region27: #{tpu_custom_call.1} parent=1 // pred_check_branch
      %675 = sbr.rel (0) target = $region29
    $region28: #{tpu_custom_call.1} parent=1 // pred_region
      %676 = dma.done [#allocation4], 128
    $region29: #{tpu_custom_call.1} parent=1 // pred_fallthru
      _
    %677 = vsyncpa [#allocation3], 1
    %678 = vsyncpa [#allocation4], 1

</llo_original>
